<compile_context>
chip_gen: v5e
topology: v5e:2x2
jax: 0.10.0
libtpu: 0.0.40
codegen_flags: <defaults>
</compile_context>

<pallas_src>
import jax
import jax.numpy as jnp
from jax.experimental import pallas as pl
from jax.experimental.pallas import tpu as pltpu

_MIB = 1024 * 1024


def _add_pe_kernel(x_ref, pe_ref, o_ref):
    # pe has a size-1 batch dim; jnp broadcasting handles it. Promotion + the
    # final cast reproduce PyTorch's `x + pe` dtype behaviour.
    o_ref[...] = (x_ref[...] + pe_ref[...]).astype(o_ref.dtype)


def _cdiv(a, b):
    return -(-a // b)


def _round_down(x, m):
    return (x // m) * m


def _vmem_budgets():
    """Returns (working_set_budget, vmem_limit_bytes) per chip generation.

    working_set_budget bounds 2 * (x_tile + out_tile + pe_tile), i.e. every
    double-buffered tile that is resident in VMEM at once.
    """
    try:
        cap = int(pltpu.get_tpu_info().vmem_capacity_bytes)
    except Exception:
        cap = 64 * _MIB  # conservative fallback: v7x per-TensorCore VMEM
    if cap >= 96 * _MIB:              # v5e / v6e: 128 MiB physical VMEM
        return 40 * _MIB, 64 * _MIB
    return 20 * _MIB, 32 * _MIB       # v7x: 64 MiB physical VMEM


def learnable_positional_encoding(x, position_embeddings, *, interpret=False):
    """Forward pass of LearnablePositionalEncoding.

    x:                   (B, S, D)
    position_embeddings: (1, max_seq_length, D)
    returns:             x + position_embeddings[:, :S, :]   -> (B, S, D)
    """
    B, S, D = x.shape
    one, max_seq_length, Dp = position_embeddings.shape
    if one != 1 or Dp != D:
        raise ValueError(
            f"position_embeddings must have shape (1, max_seq_length, {D}), "
            f"got {position_embeddings.shape}"
        )
    if S > max_seq_length:
        raise ValueError(f"sequence length {S} exceeds max_seq_length {max_seq_length}")

    out_dtype = jnp.result_type(x.dtype, position_embeddings.dtype)
    xb = jnp.dtype(x.dtype).itemsize
    pb = jnp.dtype(position_embeddings.dtype).itemsize
    ob = jnp.dtype(out_dtype).itemsize

    ws, vmem_limit = _vmem_budgets()
    half_ws = ws // 2  # per-buffer budget; double buffering doubles it

    flat = S * D
    total_x_bytes = B * flat * xb

    compiler_params = pltpu.CompilerParams(
        dimension_semantics=("parallel", "parallel"),
        vmem_limit_bytes=vmem_limit,
    )

    # ------------------------------------------------------------------
    # Path A: lane-dense 2-D layout (B, S*D); S*D is a multiple of 128.
    # ------------------------------------------------------------------
    if flat % 128 == 0:
        x_flat = x.reshape(B, flat)                                   # free view
        pe_flat = position_embeddings.reshape(1, max_seq_length * D)  # free view

        tb = B if B <= 8 else 8
        # Lane tile from the VMEM budget:
        #   half_ws >= tb*tl*(xb+ob)  (x + out tiles)  +  tl*pb  (pe tile)
        tl = half_ws // (tb * (xb + ob) + pb)
        tl = max(128, _round_down(tl, 128))
        if tl >= flat:
            tl = flat
            # Spend leftover budget on a taller batch tile: one fully
            # contiguous HBM region per block, fewer grid steps.
            if B > tb:
                tb_max = (half_ws - flat * pb) // (flat * (xb + ob))
                tb_new = _round_down(min(tb_max, B), 8)
                if tb_new > tb:
                    tb = tb_new
        n_l = _cdiv(flat, tl)
        n_b = _cdiv(B, tb)

        # v7x: keep >= 2 parallel grid steps so both TensorCores get work
        # (near-zero cost on single-TC v5e/v6e).
        if n_l * n_b == 1 and total_x_bytes >= 2 * _MIB:
            if tl >= 256:
                tl = max(128, _round_down(tl // 2, 128))
                n_l = _cdiv(flat, tl)
            elif tb >= 16:
                tb = max(8, _round_down(tb // 2, 8))
                n_b = _cdiv(B, tb)

        out_flat = pl.pallas_call(
            _add_pe_kernel,
            out_shape=jax.ShapeDtypeStruct((B, flat), out_dtype),
            grid=(n_l, n_b),  # batch innermost -> pe tile reused across batch
            in_specs=[
                pl.BlockSpec((tb, tl), lambda l, b: (b, l)),
                pl.BlockSpec((1, tl), lambda l, b: (0, l)),
            ],
            out_specs=pl.BlockSpec((tb, tl), lambda l, b: (b, l)),
            compiler_params=compiler_params,
            interpret=interpret,
        )(x_flat, pe_flat)
        return out_flat.reshape(B, S, D)

    # ------------------------------------------------------------------
    # Path B: 3-D tiling (tb, ts, D) with D as the (full) lane dim.
    # Works for any S*D; blocks stay small and pipelined.
    # ------------------------------------------------------------------
    tb = B if B <= 8 else 8
    row_bytes = D * (xb + ob)

    if S < 8:
        # Tiny sequence: slice pe (cheap) so ts == S is a legal full-extent
        # block dim for both x and pe.
        pe_in = position_embeddings[:, :S, :]
        ts = S
    else:
        pe_in = position_embeddings  # no wrapper-side slice/copy of pe
        ts = half_ws // (tb * row_bytes + D * pb)
        ts = max(8, _round_down(min(ts, S), 8))

    # Safeguard for extreme D: shrink the batch tile (leading dim, no 8x
    # constraint in 3-D) rather than exceed the working-set budget.
    while tb > 1 and tb * ts * row_bytes + ts * D * pb > half_ws:
        tb = max(1, tb // 2)

    n_s = _cdiv(S, ts)
    n_b = _cdiv(B, tb)

    if n_s * n_b == 1 and total_x_bytes >= 2 * _MIB:
        if ts >= 16:
            ts = max(8, _round_down(ts // 2, 8))
            n_s = _cdiv(S, ts)
        elif tb >= 2:
            tb = max(1, tb // 2)
            n_b = _cdiv(B, tb)

    out = pl.pallas_call(
        _add_pe_kernel,
        out_shape=jax.ShapeDtypeStruct((B, S, D), out_dtype),
        grid=(n_s, n_b),  # batch innermost -> pe tile reused across batch
        in_specs=[
            pl.BlockSpec((tb, ts, D), lambda s, b: (b, s, 0)),
            pl.BlockSpec((1, ts, D), lambda s, b: (0, s, 0)),
        ],
        out_specs=pl.BlockSpec((tb, ts, D), lambda s, b: (b, s, 0)),
        compiler_params=compiler_params,
        interpret=interpret,
    )(x, pe_in)
    return out


if __name__ == "__main__":
    key = jax.random.PRNGKey(0)
    keys = jax.random.split(key, 6)

    def _check(kx, kp, B, S, D, max_seq_length):
        x = jax.random.normal(kx, (B, S, D), dtype=jnp.float32)
        # PyTorch initializes the parameter to zeros; use a deterministic
        # non-zero table so the add is actually exercised.
        pe = 0.01 * jax.random.normal(kp, (1, max_seq_length, D), dtype=jnp.float32)
        out = jax.block_until_ready(learnable_positional_encoding(x, pe))
        ref = x + pe[:, :S, :]
        assert out.shape == ref.shape, (out.shape, ref.shape)
        assert out.dtype == ref.dtype, (out.dtype, ref.dtype)
        assert jnp.allclose(out, ref, atol=1e-6), "mismatch vs reference"

    # Primary shape: lane-dense fast path (S*D = 256, multiple of 128).
    _check(keys[0], keys[1], B=2, S=8, D=32, max_seq_length=100)
    # 3-D fallback: S*D not a multiple of 128, partial seq tile (S=9, ts=8).
    _check(keys[2], keys[3], B=2, S=9, D=24, max_seq_length=100)
    # 3-D fallback with S < 8 (sliced pe, full-extent blocks).
    _check(keys[4], keys[5], B=2, S=5, D=24, max_seq_length=100)

    print("KERNEL_OK")
</pallas_src>

<mosaic_0001>
module attributes {stable_mosaic.version = 11 : i64} {
  func.func @_add_pe_kernel(%arg0: i32, %arg1: i32, %arg2: memref<2x256xf32, #tpu.memory_space<vmem>>, %arg3: memref<1x256xf32, #tpu.memory_space<vmem>>, %arg4: memref<2x256xf32, #tpu.memory_space<vmem>>) attributes {dimension_semantics = [#tpu.dimension_semantics<parallel>, #tpu.dimension_semantics<parallel>], iteration_bounds = array<i64: 1, 1>, scalar_prefetch = 0 : i64, scratch_operands = 0 : i64, tpu.core_type = #tpu.core_type<tc>, window_params = [{transform_indices = @transform_0, window_bounds = array<i64: 2, 256>}, {transform_indices = @transform_1, window_bounds = array<i64: 1, 256>}, {transform_indices = @transform_2, window_bounds = array<i64: 2, 256>}]} {
    %c0 = arith.constant 0 : index
    %c0_0 = arith.constant 0 : index
    %0 = vector.load %arg2[%c0, %c0_0] : memref<2x256xf32, #tpu.memory_space<vmem>>, vector<2x256xf32>
    %c0_1 = arith.constant 0 : index
    %c0_2 = arith.constant 0 : index
    %1 = vector.load %arg3[%c0_1, %c0_2] : memref<1x256xf32, #tpu.memory_space<vmem>>, vector<1x256xf32>
    %2 = vector.broadcast %1 : vector<1x256xf32> to vector<2x256xf32>
    %3 = arith.addf %0, %2 : vector<2x256xf32>
    %c0_3 = arith.constant 0 : index
    %c0_4 = arith.constant 0 : index
    %4 = vector.load %arg4[%c0_3, %c0_4] : memref<2x256xf32, #tpu.memory_space<vmem>>, vector<2x256xf32>
    tpu.vector_store %arg4[%c0_3, %c0_4], %3 {strides = array<i32>} : memref<2x256xf32, #tpu.memory_space<vmem>>, vector<2x256xf32>,
    return
  }
  func.func @transform_0(%arg0: i32, %arg1: i32) -> (i32, i32) {
    %c0_i32 = arith.constant 0 : i32
    return %arg1, %arg0 : i32, i32
  }
  func.func @transform_1(%arg0: i32, %arg1: i32) -> (i32, i32) {
    %c0_i32 = arith.constant 0 : i32
    %c0_i32_0 = arith.constant 0 : i32
    return %c0_i32, %arg0 : i32, i32
  }
  func.func @transform_2(%arg0: i32, %arg1: i32) -> (i32, i32) {
    %c0_i32 = arith.constant 0 : i32
    return %arg1, %arg0 : i32, i32
  }
}

</mosaic_0001>

<llo_original>
// kernel: tpu_custom_call.1
$region0: #{tpu_custom_call.1}
  #allocation0 [shape = 'u32[]', space=smem, size = 0x4, offset = 0x4, fixed_abs, tag = 'smem constant byte address 0x4 - core index']
  #allocation1 [shape = 'u32[72,128]{1,0:T(1,128)}', space=vmem, size = 0x9000, scoped, tag = 'internal scratch']
  %s0 = inlined_call_operand.hbm [shape: f32[2,256], index: 0, kind: input, shape index: {}]
  %s1 = inlined_call_operand.hbm [shape: f32[1,3200], index: 1, kind: input, shape index: {}]
  %s2 = inlined_call_operand.hbm [shape: f32[2,256], index: 2, kind: output, shape index: {}]
  %s3 = sld [smem:[#allocation0]]
  $region26: #{tpu_custom_call.1} parent=0
    _
  %s5 = ssub.s32 1, %s3
  %s6 = scalar_select 0, %s5, %s3
  $region1: #{tpu_custom_call.1} parent=0
    #allocation2 [shape = 'u8[2048]{0}', space=vmem, size = 0x800, scoped, tag = 'input window, operand 0, single buffered']
    #allocation3 [shape = 's32[1]{0}', space=sflag, size = 0x4, scoped, tag = 'scoped memory for tpu_custom_call.1']
    #allocation4 [shape = 's32[1]{0}', space=sflag, size = 0x4, scoped, tag = 'scoped memory for tpu_custom_call.1']
    #allocation5 [shape = 'u8[1024]{0}', space=vmem, size = 0x400, scoped, tag = 'input window, operand 1, single buffered']
    #allocation6 [shape = 's32[1]{0}', space=sflag, size = 0x4, scoped, tag = 'scoped memory for tpu_custom_call.1']
    #allocation7 [shape = 'u8[2048]{0}', space=vmem, size = 0x800, scoped, tag = 'output window, operand 0, single buffered']
    %7 = vsyncpa [#allocation3], 0
    %8 = vsyncpa [#allocation6], 0
    %9 = vsyncpa [#allocation4], 0
    // Predicated region
    $region2: #{tpu_custom_call.1} parent=1 // pred_check
      _
    $region3: #{tpu_custom_call.1} parent=1 // pred_check_branch
      %11 = sbr.rel (0) target = $region5
    $region4: #{tpu_custom_call.1} parent=1 // pred_region
      %13 = vsyncadd [#allocation3], 0
      %s15 = sshll.u32 %s0, 4
      %s16 = int_to_ptr.hbm [resolvable:$true] %s15
      %s17 = sshll.u32 [#allocation2], 4
      %s18 = int_to_ptr.vmem [resolvable:$true] %s17
      %20 = dma.hbm_to_vmem [thread:$0]  %s16, 64, %s18, [#allocation3]
    $region5: #{tpu_custom_call.1} parent=1 // pred_fallthru
      _
    // Predicated region
    $region6: #{tpu_custom_call.1} parent=1 // pred_check
      _
    $region7: #{tpu_custom_call.1} parent=1 // pred_check_branch
      %22 = sbr.rel (0) target = $region9
    $region8: #{tpu_custom_call.1} parent=1 // pred_region
      %24 = vsyncadd [#allocation6], 0
      %s26 = sshll.u32 %s1, 4
      %s27 = int_to_ptr.hbm [resolvable:$true] %s26
      %s28 = sshll.u32 [#allocation5], 4
      %s29 = int_to_ptr.vmem [resolvable:$true] %s28
      %31 = dma.hbm_to_vmem [thread:$0]  %s27, 32, %s29, [#allocation6]
    $region9: #{tpu_custom_call.1} parent=1 // pred_fallthru
      _
    // Predicated region
    $region10: #{tpu_custom_call.1} parent=1 // pred_check
      _
    $region11: #{tpu_custom_call.1} parent=1 // pred_check_branch
      %33 = sbr.rel (0) target = $region13
    $region12: #{tpu_custom_call.1} parent=1 // pred_region
      %35 = dma.done [#allocation3], 64
    $region13: #{tpu_custom_call.1} parent=1 // pred_fallthru
      _
    // Predicated region
    $region14: #{tpu_custom_call.1} parent=1 // pred_check
      _
    $region15: #{tpu_custom_call.1} parent=1 // pred_check_branch
      %37 = sbr.rel (0) target = $region17
    $region16: #{tpu_custom_call.1} parent=1 // pred_region
      %39 = dma.done [#allocation6], 32
    $region17: #{tpu_custom_call.1} parent=1 // pred_fallthru
      _
    %v40 = vld [vmem:[#allocation2] sm:$0xf]
    %v41 = vld [vmem:[#allocation5] sm:$0x3]
    %v43 = vperm.slane %v41, 0
    %v44 = vperm.slane %v41, 1
    %v45 = vrot.slane %v44, 6
    %vm46 = vcmask 1041408
    %v47 = vsel %vm46, %v43, %v45
    %v49 = vadd.f32 %v40, %v47
    %50 = vst [vmem:[#allocation7] sm:$0xf] %v49
    // Predicated region
    $region18: #{tpu_custom_call.1} parent=1 // pred_check
      _
    $region19: #{tpu_custom_call.1} parent=1 // pred_check_branch
      %52 = sbr.rel (0) target = $region21
    $region20: #{tpu_custom_call.1} parent=1 // pred_region
      %54 = vsyncadd [#allocation4], 0
      %s56 = sshll.u32 [#allocation7], 4
      %s57 = int_to_ptr.vmem [resolvable:$true] %s56
      %s58 = sshll.u32 %s2, 4
      %s59 = int_to_ptr.hbm [resolvable:$true] %s58
      %61 = dma.vmem_to_hbm [thread:$0]  %s57, 64, %s59, [#allocation4]
    $region21: #{tpu_custom_call.1} parent=1 // pred_fallthru
      _
    // Predicated region
    $region22: #{tpu_custom_call.1} parent=1 // pred_check
      _
    $region23: #{tpu_custom_call.1} parent=1 // pred_check_branch
      %63 = sbr.rel (0) target = $region25
    $region24: #{tpu_custom_call.1} parent=1 // pred_region
      %65 = dma.done [#allocation4], 64
    $region25: #{tpu_custom_call.1} parent=1 // pred_fallthru
      _
    %66 = vsyncpa [#allocation3], 1
    %67 = vsyncpa [#allocation6], 1
    %68 = vsyncpa [#allocation4], 1

</llo_original>
